<compile_context>
chip_gen: v7x
topology: tpu7x:2x2x1
jax: 0.10.0
libtpu: 0.0.40
codegen_flags: <defaults>
</compile_context>

<pallas_src>
import functools

import jax
import jax.numpy as jnp
from jax import lax
from jax.experimental import pallas as pl
from jax.experimental.pallas import tpu as pltpu


def _round_up(x, m):
    return ((x + m - 1) // m) * m


def softsel_kernel(seq_ref, p_ref, q_ref, wt_ref, b_ref, o_ref, tq_ref):
    """One (batch, Sp-tile) step of SoftSel.

    seq_ref : SMEM [B] int32          (scalar prefetch: valid length per batch)
    p_ref   : VMEM [1, tsp, Hp]       proj_p row tile
    q_ref   : VMEM [1, Sqp, Hp]       full (padded) proj_q for this batch
    wt_ref  : VMEM [Hp, Hp]           trans_linear weight, pre-transposed (in, out)
    b_ref   : VMEM [1, Hp]            trans_linear bias
    o_ref   : VMEM [1, tsp, Hp]       output tile
    tq_ref  : VMEM [Sqp, Hp] scratch  cached trans_q for the current batch
    """
    bi = pl.program_id(0)
    si = pl.program_id(1)
    n_valid = seq_ref[bi]

    wt = wt_ref[...]                              # [Hp, Hp], native dtype
    bias = b_ref[...].astype(jnp.float32)         # [1, Hp]

    # trans_q = proj_q @ W^T + b   (MXU, f32 accumulate) — once per batch,
    # cached in scratch for all subsequent Sp tiles of this batch.
    @pl.when(si == 0)
    def _():
        q = q_ref[0]                              # [Sqp, Hp]
        tq = jnp.dot(q, wt, preferred_element_type=jnp.float32) + bias
        tq_ref[...] = tq.astype(tq_ref.dtype)

    p = p_ref[0]                                  # [tsp, Hp], native dtype
    trans_q = tq_ref[...]                         # [Sqp, Hp], native dtype

    # Attention scores: p @ trans_q^T -> [tsp, Sqp] (contraction on last dims;
    # canonical MXU attention pattern, no materialised transpose).
    scores = lax.dot_general(
        p, trans_q,
        dimension_numbers=(((1,), (1,)), ((), ())),
        preferred_element_type=jnp.float32)

    # masked_softmax, reproducing the PyTorch arithmetic:
    #   soft = softmax(scores * mask); soft *= mask
    #   att_norm = soft / (soft.sum(-1) + 1e-13)
    # which is algebraically (e*mask) / (sum(e*mask) + 1e-13 * sum(e)).
    # Columns >= seq_len (including the Sq padding) have mask == 0.
    col = lax.broadcasted_iota(jnp.int32, scores.shape, 1)
    mask = (col < n_valid).astype(jnp.float32)
    x = scores * mask
    x_max = jnp.max(x, axis=-1, keepdims=True)
    e = jnp.exp(x - x_max)
    e_masked = e * mask
    s_all = jnp.sum(e, axis=-1, keepdims=True)
    s_valid = jnp.sum(e_masked, axis=-1, keepdims=True)
    inv = 1.0 / (s_valid + 1e-13 * s_all)         # [tsp, 1] exact divide
    att_norm = e_masked * inv

    # att_vec = att_norm @ proj_q -> [tsp, Hp].
    q = q_ref[0]
    att_vec = jnp.dot(att_norm.astype(q.dtype), q,
                      preferred_element_type=jnp.float32)

    # out = relu(att_vec @ W^T + b)  (same resident weight, second use).
    out = jnp.dot(att_vec.astype(wt.dtype), wt,
                  preferred_element_type=jnp.float32) + bias
    o_ref[0] = jnp.maximum(out, 0.0).astype(o_ref.dtype)


@functools.partial(jax.jit, static_argnames=("row_tile",))
def softsel_forward(proj_p, proj_q, seq_len, w, b, *, row_tile=256):
    """proj_p: [B, Sp, H], proj_q: [B, Sq, H], seq_len: [B] int,
    w: [H, H] (PyTorch nn.Linear weight, out x in), b: [H]."""
    B, Sp, H = proj_p.shape
    _, Sq, _ = proj_q.shape
    dtype = proj_p.dtype

    # Lane-dense padding: H and Sq padded up to multiples of 128. Padded q
    # rows pick up the bias through the linear, but the seq_len mask
    # (seq_len <= Sq <= Sqp) zeroes those attention columns, so the result is
    # unchanged; padded H columns stay exactly zero through both linears.
    Hp = _round_up(H, 128)
    Sqp = _round_up(Sq, 128)
    tsp = min(row_tile, _round_up(Sp, 8))
    n_sp = pl.cdiv(Sp, tsp)
    Spp = n_sp * tsp

    def pad(x, shape):
        widths = [(0, t - s) for s, t in zip(x.shape, shape)]
        return jnp.pad(x, widths) if any(wd[1] for wd in widths) else x

    p_pad = pad(proj_p, (B, Spp, Hp))
    q_pad = pad(proj_q, (B, Sqp, Hp))
    wt_pad = pad(w.T, (Hp, Hp))                 # (in, out) so kernel does x @ Wt
    b_pad = pad(b.reshape(1, H), (1, Hp))
    seq_len = seq_len.astype(jnp.int32)

    out = pl.pallas_call(
        softsel_kernel,
        out_shape=jax.ShapeDtypeStruct((B, Spp, Hp), dtype),
        grid_spec=pltpu.PrefetchScalarGridSpec(
            num_scalar_prefetch=1,
            grid=(B, n_sp),
            in_specs=[
                pl.BlockSpec((1, tsp, Hp), lambda bi, si, seq: (bi, si, 0)),  # proj_p tile
                pl.BlockSpec((1, Sqp, Hp), lambda bi, si, seq: (bi, 0, 0)),   # proj_q (per batch)
                pl.BlockSpec((Hp, Hp), lambda bi, si, seq: (0, 0)),           # W^T resident
                pl.BlockSpec((1, Hp), lambda bi, si, seq: (0, 0)),            # bias resident
            ],
            out_specs=pl.BlockSpec((1, tsp, Hp), lambda bi, si, seq: (bi, si, 0)),
            scratch_shapes=[pltpu.VMEM((Sqp, Hp), dtype)],                    # cached trans_q
        ),
        compiler_params=pltpu.CompilerParams(
            dimension_semantics=("parallel", "arbitrary")),
    )(seq_len, p_pad, q_pad, wt_pad, b_pad)

    return out[:, :Sp, :H]


def softsel_reference(proj_p, proj_q, seq_len, w, b):
    trans_q = jnp.einsum("bqh,oh->bqo", proj_q, w) + b
    att = jnp.einsum("bph,bqh->bpq", proj_p, trans_q)
    col = jnp.arange(att.shape[-1])
    mask = (col[None, None, :] < seq_len[:, None, None]).astype(att.dtype)
    x = att * mask
    soft = jax.nn.softmax(x, axis=-1)
    soft = soft * mask
    att_norm = soft / (soft.sum(axis=-1, keepdims=True) + 1e-13)
    att_vec = jnp.einsum("bpq,bqh->bph", att_norm, proj_q)
    out = jnp.einsum("bph,oh->bpo", att_vec, w) + b
    return jax.nn.relu(out)


if __name__ == "__main__":
    # Small shapes consistent with the module: batch=2, seq=8, hidden=32.
    B, S, H = 2, 8, 32
    key = jax.random.PRNGKey(0)
    kp, kq, kw, kb = jax.random.split(key, 4)

    proj_p = jax.random.normal(kp, (B, S, H), dtype=jnp.float32)
    proj_q = jax.random.normal(kq, (B, S, H), dtype=jnp.float32)
    seq_len = jnp.array([S, 5], dtype=jnp.int32)   # one full, one masked row

    # trans_linear parameters (PyTorch layout: [out, in]).
    w = jax.random.normal(kw, (H, H), dtype=jnp.float32) * 0.05
    b = jax.random.normal(kb, (H,), dtype=jnp.float32) * 0.05

    out = softsel_forward(proj_p, proj_q, seq_len, w, b)
    out = jax.block_until_ready(out)

    ref = softsel_reference(proj_p, proj_q, seq_len, w, b)
    assert out.shape == (B, S, H)
    assert jnp.allclose(out, ref, atol=1e-5, rtol=1e-5), (
        "mismatch vs reference: max abs err = "
        f"{float(jnp.max(jnp.abs(out - ref)))}")

    print("KERNEL_OK")
</pallas_src>

<mosaic_0001>
module attributes {stable_mosaic.version = 11 : i64} {
  func.func @softsel_kernel(%arg0: i32, %arg1: i32, %arg2: memref<2xi32, #tpu.memory_space<smem>>, %arg3: memref<1x8x128xf32, #tpu.memory_space<vmem>>, %arg4: memref<1x128x128xf32, #tpu.memory_space<vmem>>, %arg5: memref<128x128xf32, #tpu.memory_space<vmem>>, %arg6: memref<1x128xf32, #tpu.memory_space<vmem>>, %arg7: memref<1x8x128xf32, #tpu.memory_space<vmem>>, %arg8: memref<128x128xf32, #tpu.memory_space<vmem>>) attributes {dimension_semantics = [#tpu.dimension_semantics<parallel>, #tpu.dimension_semantics<arbitrary>], iteration_bounds = array<i64: 2, 1>, scalar_prefetch = 1 : i64, scratch_operands = 1 : i64, tpu.core_type = #tpu.core_type<tc>, window_params = [{transform_indices = @transform_0, window_bounds = array<i64: 1, 8, 128>}, {transform_indices = @transform_1, window_bounds = array<i64: 1, 128, 128>}, {pipeline_mode = #tpu.pipeline_mode<synchronous>, transform_indices = @transform_2, window_bounds = array<i64: 128, 128>}, {pipeline_mode = #tpu.pipeline_mode<synchronous>, transform_indices = @transform_3, window_bounds = array<i64: 1, 128>}, {transform_indices = @transform_4, window_bounds = array<i64: 1, 8, 128>}]} {
    %0 = arith.index_cast %arg0 : i32 to index
    %1 = memref.load %arg2[%0] : memref<2xi32, #tpu.memory_space<smem>>
    %c0 = arith.constant 0 : index
    %c0_0 = arith.constant 0 : index
    %2 = vector.load %arg5[%c0, %c0_0] : memref<128x128xf32, #tpu.memory_space<vmem>>, vector<128x128xf32>
    %c0_1 = arith.constant 0 : index
    %c0_2 = arith.constant 0 : index
    %3 = vector.load %arg6[%c0_1, %c0_2] : memref<1x128xf32, #tpu.memory_space<vmem>>, vector<1x128xf32>
    %c0_i32 = arith.constant 0 : i32
    %4 = arith.cmpi eq, %arg1, %c0_i32 : i32
    %5 = arith.extui %4 : i1 to i32
    %c0_i32_3 = arith.constant 0 : i32
    %6 = arith.cmpi ne, %5, %c0_i32_3 : i32
    scf.if %6 {
      %c0_23 = arith.constant 0 : index
      %c0_24 = arith.constant 0 : index
      %c0_25 = arith.constant 0 : index
      %45 = vector.load %arg4[%c0_23, %c0_24, %c0_25] : memref<1x128x128xf32, #tpu.memory_space<vmem>>, vector<1x128x128xf32>
      %46 = vector.shape_cast %45 : vector<1x128x128xf32> to vector<128x128xf32>
      %cst_26 = arith.constant dense<0.000000e+00> : vector<128x128xf32>
      %47 = tpu.matmul %46, %2, %cst_26 {dimension_numbers = #tpu.dot_dimension_numbers<[1], [0], [0], [1], [0, 0, 1, 1], [], []>} : vector<128x128xf32>, vector<128x128xf32>, vector<128x128xf32> -> vector<128x128xf32>
      %48 = vector.broadcast %3 : vector<1x128xf32> to vector<128x128xf32>
      %49 = arith.addf %47, %48 : vector<128x128xf32>
      %c0_27 = arith.constant 0 : index
      %c0_28 = arith.constant 0 : index
      %50 = vector.load %arg8[%c0_27, %c0_28] : memref<128x128xf32, #tpu.memory_space<vmem>>, vector<128x128xf32>
      tpu.vector_store %arg8[%c0_27, %c0_28], %49 {strides = array<i32>} : memref<128x128xf32, #tpu.memory_space<vmem>>, vector<128x128xf32>,
    } else {
    }
    %c0_4 = arith.constant 0 : index
    %c0_5 = arith.constant 0 : index
    %c0_6 = arith.constant 0 : index
    %7 = vector.load %arg3[%c0_4, %c0_5, %c0_6] : memref<1x8x128xf32, #tpu.memory_space<vmem>>, vector<1x8x128xf32>
    %8 = vector.shape_cast %7 : vector<1x8x128xf32> to vector<8x128xf32>
    %c0_7 = arith.constant 0 : index
    %c0_8 = arith.constant 0 : index
    %9 = vector.load %arg8[%c0_7, %c0_8] : memref<128x128xf32, #tpu.memory_space<vmem>>, vector<128x128xf32>
    %cst = arith.constant dense<0.000000e+00> : vector<8x128xf32>
    %10 = tpu.matmul %8, %9, %cst {dimension_numbers = #tpu.dot_dimension_numbers<[1], [1], [0], [0], [0, 0, 1, 0], [], []>} : vector<8x128xf32>, vector<128x128xf32>, vector<8x128xf32> -> vector<8x128xf32>
    %11 = tpu.iota {dimensions = array<i32: 1>} : vector<8x128xi32>
    %12 = vector.broadcast %1 : i32 to vector<8x128xi32>
    %13 = arith.cmpi slt, %11, %12 : vector<8x128xi32>
    %14 = arith.extui %13 : vector<8x128xi1> to vector<8x128xi32>
    %15 = arith.sitofp %14 : vector<8x128xi32> to vector<8x128xf32>
    %16 = arith.mulf %10, %15 : vector<8x128xf32>
    %cst_9 = arith.constant dense<0xFF800000> : vector<8xf32>
    %17 = vector.multi_reduction <maximumf>, %16, %cst_9 [1] : vector<8x128xf32> to vector<8xf32>
    %18 = vector.shape_cast %17 : vector<8xf32> to vector<8x1xf32>
    %19 = vector.broadcast %18 : vector<8x1xf32> to vector<8x128xf32>
    %20 = arith.subf %16, %19 : vector<8x128xf32>
    %21 = math.exp %20 : vector<8x128xf32>
    %22 = arith.mulf %21, %15 : vector<8x128xf32>
    %cst_10 = arith.constant dense<0.000000e+00> : vector<8xf32>
    %23 = vector.multi_reduction <add>, %21, %cst_10 [1] : vector<8x128xf32> to vector<8xf32>
    %24 = vector.shape_cast %23 : vector<8xf32> to vector<8x1xf32>
    %cst_11 = arith.constant dense<0.000000e+00> : vector<8xf32>
    %25 = vector.multi_reduction <add>, %22, %cst_11 [1] : vector<8x128xf32> to vector<8xf32>
    %26 = vector.shape_cast %25 : vector<8xf32> to vector<8x1xf32>
    %cst_12 = arith.constant 9.99999982E-14 : f32
    %27 = vector.broadcast %cst_12 : f32 to vector<8x1xf32>
    %28 = arith.mulf %27, %24 : vector<8x1xf32>
    %29 = arith.addf %26, %28 : vector<8x1xf32>
    %cst_13 = arith.constant 1.000000e+00 : f32
    %30 = vector.broadcast %cst_13 : f32 to vector<8x1xf32>
    %31 = arith.divf %30, %29 : vector<8x1xf32>
    %32 = vector.broadcast %31 : vector<8x1xf32> to vector<8x128xf32>
    %33 = arith.mulf %22, %32 : vector<8x128xf32>
    %c0_14 = arith.constant 0 : index
    %c0_15 = arith.constant 0 : index
    %c0_16 = arith.constant 0 : index
    %34 = vector.load %arg4[%c0_14, %c0_15, %c0_16] : memref<1x128x128xf32, #tpu.memory_space<vmem>>, vector<1x128x128xf32>
    %35 = vector.shape_cast %34 : vector<1x128x128xf32> to vector<128x128xf32>
    %cst_17 = arith.constant dense<0.000000e+00> : vector<8x128xf32>
    %36 = tpu.matmul %33, %35, %cst_17 {dimension_numbers = #tpu.dot_dimension_numbers<[1], [0], [0], [1], [0, 0, 1, 1], [], []>} : vector<8x128xf32>, vector<128x128xf32>, vector<8x128xf32> -> vector<8x128xf32>
    %cst_18 = arith.constant dense<0.000000e+00> : vector<8x128xf32>
    %37 = tpu.matmul %36, %2, %cst_18 {dimension_numbers = #tpu.dot_dimension_numbers<[1], [0], [0], [1], [0, 0, 1, 1], [], []>} : vector<8x128xf32>, vector<128x128xf32>, vector<8x128xf32> -> vector<8x128xf32>
    %38 = vector.broadcast %3 : vector<1x128xf32> to vector<8x128xf32>
    %39 = arith.addf %37, %38 : vector<8x128xf32>
    %cst_19 = arith.constant 0.000000e+00 : f32
    %40 = vector.broadcast %cst_19 : f32 to vector<8x128xf32>
    %41 = arith.maximumf %39, %40 : vector<8x128xf32>
    %c0_20 = arith.constant 0 : index
    %c0_21 = arith.constant 0 : index
    %c0_22 = arith.constant 0 : index
    %42 = vector.load %arg7[%c0_20, %c0_21, %c0_22] : memref<1x8x128xf32, #tpu.memory_space<vmem>>, vector<1x8x128xf32>
    %43 = vector.shape_cast %42 : vector<1x8x128xf32> to vector<8x128xf32>
    %44 = vector.shape_cast %41 : vector<8x128xf32> to vector<1x8x128xf32>
    tpu.vector_store %arg7[%c0_20, %c0_21, %c0_22], %44 {strides = array<i32>} : memref<1x8x128xf32, #tpu.memory_space<vmem>>, vector<1x8x128xf32>,
    return
  }
  func.func @transform_0(%arg0: i32, %arg1: i32, %arg2: memref<2xi32, #tpu.memory_space<smem>>) -> (i32, i32, i32) {
    %c0_i32 = arith.constant 0 : i32
    %c0_i32_0 = arith.constant 0 : i32
    return %arg0, %arg1, %c0_i32 : i32, i32, i32
  }
  func.func @transform_1(%arg0: i32, %arg1: i32, %arg2: memref<2xi32, #tpu.memory_space<smem>>) -> (i32, i32, i32) {
    %c0_i32 = arith.constant 0 : i32
    %c0_i32_0 = arith.constant 0 : i32
    %c0_i32_1 = arith.constant 0 : i32
    return %arg0, %c0_i32, %c0_i32_0 : i32, i32, i32
  }
  func.func @transform_2(%arg0: i32, %arg1: i32, %arg2: memref<2xi32, #tpu.memory_space<smem>>) -> (i32, i32) {
    %c0_i32 = arith.constant 0 : i32
    %c0_i32_0 = arith.constant 0 : i32
    %c0_i32_1 = arith.constant 0 : i32
    return %c0_i32, %c0_i32_0 : i32, i32
  }
  func.func @transform_3(%arg0: i32, %arg1: i32, %arg2: memref<2xi32, #tpu.memory_space<smem>>) -> (i32, i32) {
    %c0_i32 = arith.constant 0 : i32
    %c0_i32_0 = arith.constant 0 : i32
    %c0_i32_1 = arith.constant 0 : i32
    return %c0_i32, %c0_i32_0 : i32, i32
  }
  func.func @transform_4(%arg0: i32, %arg1: i32, %arg2: memref<2xi32, #tpu.memory_space<smem>>) -> (i32, i32, i32) {
    %c0_i32 = arith.constant 0 : i32
    %c0_i32_0 = arith.constant 0 : i32
    return %arg0, %arg1, %c0_i32 : i32, i32, i32
  }
}

</mosaic_0001>

<llo_original>
// kernel: softsel_forward.1
$region0: #{softsel_forward.1}
  #allocation0 [shape = 'u32[]', space=smem, size = 0x4, offset = 0x4, fixed_abs, tag = 'smem constant byte address 0x4 - core index']
  #allocation1 [shape = 'u32[144,128]{1,0:T(1,128)}', space=vmem, size = 0x12000, scoped, tag = 'internal scratch']
  #allocation2 [shape = 'f32[128,128]{1,0:T(8,128)}', space=vmem, size = 0x10000, scoped, tag = 'scratch operand']
  #allocation3 [shape = 's32[1]{0}', space=sflag, size = 0x4, scoped, tag = 'scoped memory for softsel_forward.1']
  #allocation4 [shape = 'u8[512]{0}', space=smem, size = 0x200, scoped, tag = 'prefetched SMEM operand 0']
  %s0 = inlined_call_operand.vmem [shape: s32[2], index: 0, kind: input, shape index: {}]
  %s1 = inlined_call_operand.vmem [shape: f32[2,8,128], index: 1, kind: input, shape index: {}]
  %s2 = inlined_call_operand.vmem [shape: f32[2,128,128], index: 2, kind: input, shape index: {}]
  %s3 = inlined_call_operand.vmem [shape: f32[128,128], index: 3, kind: input, shape index: {}]
  %s4 = inlined_call_operand.vmem [shape: f32[1,128], index: 4, kind: input, shape index: {}]
  %s5 = inlined_call_operand.hbm [shape: f32[2,8,128], index: 5, kind: output, shape index: {}]
  %s6 = sld [smem:[#allocation0]]
  $region53: #{softsel_forward.1} parent=0
    _
  %s8 = ssub.s32 1, %s6
  %s9 = scalar_select 0, %s8, %s6
  %s10 = sshll.u32 %s0, 4
  %s11 = int_to_ptr.vmem [resolvable:$true] %s10
  %13 = dma.vmem_to_smem %s11, 16, [#allocation4], [#allocation3]
  %14 = dma.done [#allocation3], 16
  %15 = sfence
  $region1: #{softsel_forward.1} parent=0
    #allocation5 [shape = 'u8[8192]{0}', space=vmem, size = 0x2000, scoped, tag = 'output window, operand 0']
    #allocation6 [shape = 's32[2]{0}', space=sflag, size = 0x8, scoped, tag = 'scoped memory for softsel_forward.1']
    %16 = vsyncpa [#allocation6], 0
    %s17 = scalar_lea.sflag [#allocation6], 1
    %18 = vsyncpa %s17, 0
    loop: start=0, step=1, limit=4
    $region2: #{softsel_forward.1} parent=1 // loop_pre_header
      _
    $region3: #{softsel_forward.1} parent=1 // loop_header
      %s20 = sphi 0, %s24
      %p21 = scmp.ge.s32.totalorder %s20, 4
      %s27 = sphi 0, %s39
      %s28 = sphi 0, %s35
      %s29 = sphi 0, %s27
      %s30 = sphi 0, %s28
      %s31 = sphi 0, %s29
      %s32 = sphi 0, %s30
      %s44 = sphi 0, %s46
      %s47 = sphi 0, %s44
      %s48 = sphi 0, %s47
      %s64 = sphi 0, %s48
      %s70 = sphi 0, %s72
      %s73 = sphi 0, %s70
      %s74 = sphi 0, %s73
      %s90 = sphi 0, %s74
      %s94 = sphi 0, %s94
      %s96 = sphi 0, %s94
      %s97 = sphi 0, %s96
      %s111 = sphi 0, %s97
      %s115 = sphi 0, %s115
      %s117 = sphi 0, %s115
      %s118 = sphi 0, %s117
      %s132 = sphi 0, %s118
      %s140 = sphi 0, %s142
      %s143 = sphi 0, %s140
      %s144 = sphi 0, %s143
      %s160 = sphi 0, %s144
    $region4: #{softsel_forward.1} parent=1 // loop_header_branch
      %23 = sbr.rel (%p21) target = $region8
    $region5: #{softsel_forward.1} parent=1 // loop_body
      %s25 = ssub.s32 %s20, 1
      %s26 = ssub.s32 %s20, 2
      %s33 = sadd.s32 1, %s28
      %p34 = scmp.ge.s32.totalorder %s33, 1
      %s35 = scalar_select %p34, 0, %s33
      %s36 = sadd.s32 1, %s27
      %s37 = scalar_select %p34, %s36, %s27
      %p38 = scmp.ge.s32.totalorder %s37, 2
      %s39 = scalar_select %p38, 0, %s37
      %s40 = ssub.s32 %s27, %s39
      %s41 = ssub.s32 %s28, %s35
      %s42 = sor.u32 %s40, %s41
      %p43 = scmp.eq.s32.totalorder %s42, 0
      %s45 = sadd.s32 %s44, 1
      %s46 = scalar_select %p43, %s44, %s45
      %p49 = pneg %p43
      %p50 = scmp.eq.s32.totalorder %s20, 1
      %p51 = por %p49, %p50
      %p52 = scmp.ne.s32.totalorder %s44, %s47
      %p53 = scmp.eq.s32.totalorder %s20, 0
      %p54 = por %p52, %p53
      %p55 = scmp.ne.s32.totalorder %s44, %s47
      %p56 = scmp.eq.s32.totalorder %s25, 1
      %p57 = por %p55, %p56
      %p58 = scmp.ne.s32.totalorder %s47, %s48
      %p59 = scmp.eq.s32.totalorder %s25, 0
      %p60 = por %p58, %p59
      %p61 = scmp.ne.s32.totalorder %s47, %s48
      %p62 = scmp.eq.s32.totalorder %s26, 1
      %p63 = por %p61, %p62
      %p65 = scmp.ne.s32.totalorder %s48, %s64
      %p66 = scmp.eq.s32.totalorder %s26, 0
      %p67 = por %p65, %p66
      %s68 = ssub.s32 %s27, %s39
      %p69 = scmp.eq.s32.totalorder %s68, 0
      %s71 = sadd.s32 %s70, 1
      %s72 = scalar_select %p69, %s70, %s71
      %p75 = pneg %p69
      %p76 = scmp.eq.s32.totalorder %s20, 1
      %p77 = por %p75, %p76
      %p78 = scmp.ne.s32.totalorder %s70, %s73
      %p79 = scmp.eq.s32.totalorder %s20, 0
      %p80 = por %p78, %p79
      %p81 = scmp.ne.s32.totalorder %s70, %s73
      %p82 = scmp.eq.s32.totalorder %s25, 1
      %p83 = por %p81, %p82
      %p84 = scmp.ne.s32.totalorder %s73, %s74
      %p85 = scmp.eq.s32.totalorder %s25, 0
      %p86 = por %p84, %p85
      %p87 = scmp.ne.s32.totalorder %s73, %s74
      %p88 = scmp.eq.s32.totalorder %s26, 1
      %p89 = por %p87, %p88
      %p91 = scmp.ne.s32.totalorder %s74, %s90
      %p92 = scmp.eq.s32.totalorder %s26, 0
      %p93 = por %p91, %p92
      %s95 = sadd.s32 %s94, 1
      %p98 = scmp.eq.s32.totalorder %s20, 1
      %p99 = scmp.ne.s32.totalorder %s94, %s96
      %p100 = scmp.eq.s32.totalorder %s20, 0
      %p101 = por %p99, %p100
      %p102 = scmp.ne.s32.totalorder %s94, %s96
      %p103 = scmp.eq.s32.totalorder %s25, 1
      %p104 = por %p102, %p103
      %p105 = scmp.ne.s32.totalorder %s96, %s97
      %p106 = scmp.eq.s32.totalorder %s25, 0
      %p107 = por %p105, %p106
      %p108 = scmp.ne.s32.totalorder %s96, %s97
      %p109 = scmp.eq.s32.totalorder %s26, 1
      %p110 = por %p108, %p109
      %p112 = scmp.ne.s32.totalorder %s97, %s111
      %p113 = scmp.eq.s32.totalorder %s26, 0
      %p114 = por %p112, %p113
      %s116 = sadd.s32 %s115, 1
      %p119 = scmp.eq.s32.totalorder %s20, 1
      %p120 = scmp.ne.s32.totalorder %s115, %s117
      %p121 = scmp.eq.s32.totalorder %s20, 0
      %p122 = por %p120, %p121
      %p123 = scmp.ne.s32.totalorder %s115, %s117
      %p124 = scmp.eq.s32.totalorder %s25, 1
      %p125 = por %p123, %p124
      %p126 = scmp.ne.s32.totalorder %s117, %s118
      %p127 = scmp.eq.s32.totalorder %s25, 0
      %p128 = por %p126, %p127
      %p129 = scmp.ne.s32.totalorder %s117, %s118
      %p130 = scmp.eq.s32.totalorder %s26, 1
      %p131 = por %p129, %p130
      %p133 = scmp.ne.s32.totalorder %s118, %s132
      %p134 = scmp.eq.s32.totalorder %s26, 0
      %p135 = por %p133, %p134
      %s136 = ssub.s32 %s27, %s39
      %s137 = ssub.s32 %s28, %s35
      %s138 = sor.u32 %s136, %s137
      %p139 = scmp.eq.s32.totalorder %s138, 0
      %s141 = sadd.s32 %s140, 1
      %s142 = scalar_select %p139, %s140, %s141
      %p145 = pneg %p139
      %p146 = scmp.eq.s32.totalorder %s20, 1
      %p147 = por %p145, %p146
      %p148 = scmp.ne.s32.totalorder %s140, %s143
      %p149 = scmp.eq.s32.totalorder %s20, 0
      %p150 = por %p148, %p149
      %p151 = scmp.ne.s32.totalorder %s140, %s143
      %p152 = scmp.eq.s32.totalorder %s25, 1
      %p153 = por %p151, %p152
      %p154 = scmp.ne.s32.totalorder %s143, %s144
      %p155 = scmp.eq.s32.totalorder %s25, 0
      %p156 = por %p154, %p155
      %p157 = scmp.ne.s32.totalorder %s143, %s144
      %p158 = scmp.eq.s32.totalorder %s26, 1
      %p159 = por %p157, %p158
      %p161 = scmp.ne.s32.totalorder %s144, %s160
      %p162 = scmp.eq.s32.totalorder %s26, 0
      %p163 = por %p161, %p162
      %p164 = scmp.le.s32.totalorder 1, %s20
      %p165 = scmp.lt.s32.totalorder %s20, 3
      %p166 = pnand %p164, %p165
      %p167 = pneg %p166
      // Predicated region
      $region9: #{softsel_forward.1} parent=5 // pred_check
        _
      $region10: #{softsel_forward.1} parent=5 // pred_check_branch
        %169 = sbr.rel (%p166) target = $region12
      $region11: #{softsel_forward.1} parent=5 // pred_region
        %s170 = ssub.s32 %s20, 1
        // Predicated region
        $region13: #{softsel_forward.1} parent=11 // pred_check
          %p171 = pneg %p107
        $region14: #{softsel_forward.1} parent=11 // pred_check_branch
          %173 = sbr.rel (%p171) target = $region16
        $region15: #{softsel_forward.1} parent=11 // pred_region
          _
        $region16: #{softsel_forward.1} parent=11 // pred_fallthru
          _
        // Predicated region
        $region17: #{softsel_forward.1} parent=11 // pred_check
          %p174 = pneg %p128
        $region18: #{softsel_forward.1} parent=11 // pred_check_branch
          %176 = sbr.rel (%p174) target = $region20
        $region19: #{softsel_forward.1} parent=11 // pred_region
          _
        $region20: #{softsel_forward.1} parent=11 // pred_fallthru
          _
      $region12: #{softsel_forward.1} parent=5 // pred_fallthru
        _
      %p177 = scmp.lt.s32.totalorder %s20, 2
      // Predicated region
      $region21: #{softsel_forward.1} parent=5 // pred_check
        %p178 = pneg %p177
      $region22: #{softsel_forward.1} parent=5 // pred_check_branch
        %180 = sbr.rel (%p178) target = $region24
      $region23: #{softsel_forward.1} parent=5 // pred_region
        // Predicated region
        $region25: #{softsel_forward.1} parent=23 // pred_check
          %p181 = pneg %p54
        $region26: #{softsel_forward.1} parent=23 // pred_check_branch
          %183 = sbr.rel (%p181) target = $region28
        $region27: #{softsel_forward.1} parent=23 // pred_region
          %p184 = scmp.lt.s32.totalorder %s27, 1
          %s185 = scalar_select %p184, %s27, 1
          %p186 = scmp.lt.s32.totalorder %s28, 0
          %s187 = scalar_select %p186, %s28, 0
          %s188 = sadd.s32 %s187, %s185
          %s189 = smul.addr %s188, 8
          %s190 = scalar_lea.vmem %s1, %s189
        $region28: #{softsel_forward.1} parent=23 // pred_fallthru
          _
        // Predicated region
        $region29: #{softsel_forward.1} parent=23 // pred_check
          %p191 = pneg %p80
        $region30: #{softsel_forward.1} parent=23 // pred_check_branch
          %193 = sbr.rel (%p191) target = $region32
        $region31: #{softsel_forward.1} parent=23 // pred_region
          %p194 = scmp.lt.s32.totalorder %s27, 1
          %s195 = scalar_select %p194, %s27, 1
          %s196 = smul.addr %s195, 16
          %s197 = smul.addr %s196, 8
          %s198 = scalar_lea.vmem %s2, %s197
        $region32: #{softsel_forward.1} parent=23 // pred_fallthru
          _
      $region24: #{softsel_forward.1} parent=5 // pred_fallthru
        _
      %p199 = scmp.le.s32.totalorder 1, %s20
      %p200 = scmp.lt.s32.totalorder %s20, 3
      %p201 = pnand %p199, %p200
      %p202 = pneg %p201
      // Predicated region
      $region33: #{softsel_forward.1} parent=5 // pred_check
        _
      $region34: #{softsel_forward.1} parent=5 // pred_check_branch
        %204 = sbr.rel (%p201) target = $region36
      $region35: #{softsel_forward.1} parent=5 // pred_region
        %s205 = ssub.s32 %s20, 1
        %p206 = scmp.lt.s32.totalorder %s29, 1
        %s207 = scalar_select %p206, %s29, 1
        %p208 = scmp.lt.s32.totalorder %s30, 0
        %s209 = scalar_select %p208, %s30, 0
        %s210 = sadd.s32 %s209, %s207
        %s211 = smul.addr %s210, 8
        %s212 = scalar_lea.vmem %s1, %s211
        %p213 = pneg %p60
        %p214 = pneg %p57
        %p215 = scmp.lt.s32.totalorder %s29, 1
        %s216 = scalar_select %p215, %s29, 1
        %s217 = smul.addr %s216, 16
        %s218 = smul.addr %s217, 8
        %s219 = scalar_lea.vmem %s2, %s218
        %p220 = pneg %p86
        %p221 = pneg %p83
        %p222 = pneg %p107
        %p223 = pneg %p104
        %p224 = pneg %p128
        %p225 = pneg %p125
        %p226 = pneg %p156
        %p227 = pneg %p153
        %s228 = sand.u32 %s143, 1
        %s229 = scalar_lea.sflag [#allocation6], %s228
        %s230 = sand.u32 %s143, 1
        %s231 = smul.addr %s230, 8
        %s232 = scalar_lea.vmem [#allocation5], %s231
        %p233 = scmp.lt.s32.totalorder %s29, 1
        %s234 = scalar_select %p233, %s29, 1
        %p235 = scmp.lt.s32.totalorder %s30, 0
        %s236 = scalar_select %p235, %s30, 0
        %s237 = sadd.s32 %s236, %s234
        %s238 = smul.addr %s237, 8
        %s239 = scalar_lea.vmem %s1, %s238
        %p240 = scmp.lt.s32.totalorder %s29, 1
        %s241 = scalar_select %p240, %s29, 1
        %s242 = smul.addr %s241, 16
        %s243 = smul.addr %s242, 8
        %s244 = scalar_lea.vmem %s2, %s243
        %s245 = sld [smem:[#allocation4 + %s29]]
        %v246 = vld [vmem:[%s3] sm:$0xff]
        %v247 = vld [vmem:[%s3 + $0x8] sm:$0xff]
        %v248 = vld [vmem:[%s3 + $0x10] sm:$0xff]
        %v249 = vld [vmem:[%s3 + $0x18] sm:$0xff]
        %v250 = vld [vmem:[%s3 + $0x20] sm:$0xff]
        %v251 = vld [vmem:[%s3 + $0x28] sm:$0xff]
        %v252 = vld [vmem:[%s3 + $0x30] sm:$0xff]
        %v253 = vld [vmem:[%s3 + $0x38] sm:$0xff]
        %v254 = vld [vmem:[%s3 + $0x40] sm:$0xff]
        %v255 = vld [vmem:[%s3 + $0x48] sm:$0xff]
        %v256 = vld [vmem:[%s3 + $0x50] sm:$0xff]
        %v257 = vld [vmem:[%s3 + $0x58] sm:$0xff]
        %v258 = vld [vmem:[%s3 + $0x60] sm:$0xff]
        %v259 = vld [vmem:[%s3 + $0x68] sm:$0xff]
        %v260 = vld [vmem:[%s3 + $0x70] sm:$0xff]
        %v261 = vld [vmem:[%s3 + $0x78] sm:$0xff]
        %v262 = vld [vmem:[%s4] sm:$0x1]
        %p263 = scmp.eq.s32.totalorder %s30, 0
        // Predicated region
        $region37: #{softsel_forward.1} parent=35 // pred_check
          %p264 = pneg %p263
        $region38: #{softsel_forward.1} parent=35 // pred_check_branch
          %266 = sbr.rel (%p264) target = $region40
        $region39: #{softsel_forward.1} parent=35 // pred_region
          %v267 = vld [vmem:[%s244] sm:$0xff]
          %v268 = vld [vmem:[%s244 + $0x8] sm:$0xff]
          %v269 = vld [vmem:[%s244 + $0x10] sm:$0xff]
          %v270 = vld [vmem:[%s244 + $0x18] sm:$0xff]
          %v271 = vld [vmem:[%s244 + $0x20] sm:$0xff]
          %v272 = vld [vmem:[%s244 + $0x28] sm:$0xff]
          %v273 = vld [vmem:[%s244 + $0x30] sm:$0xff]
          %v274 = vld [vmem:[%s244 + $0x38] sm:$0xff]
          %v275 = vld [vmem:[%s244 + $0x40] sm:$0xff]
          %v276 = vld [vmem:[%s244 + $0x48] sm:$0xff]
          %v277 = vld [vmem:[%s244 + $0x50] sm:$0xff]
          %v278 = vld [vmem:[%s244 + $0x58] sm:$0xff]
          %v279 = vld [vmem:[%s244 + $0x60] sm:$0xff]
          %v280 = vld [vmem:[%s244 + $0x68] sm:$0xff]
          %v281 = vld [vmem:[%s244 + $0x70] sm:$0xff]
          %v282 = vld [vmem:[%s244 + $0x78] sm:$0xff]
          %v284 = vlaneseq
          %v285 = vshrl.u32 %v284, 7
          %v286 = vsub.s32 0, %v285
          %v287 = vrot.slane %v262, %v286
          %289 = vmatprep.subr.mxu0 0.0
          %290 = vmatpush1.msra.mxu0 %v246
          %291 = vmatprep.subr.mxu0 0.0
          %292 = vmatpush1.msra.mxu0 %v247
          %293 = vmatprep.subr.mxu0 0.0
          %294 = vmatpush1.msra.mxu0 %v248
          %295 = vmatprep.subr.mxu0 0.0
          %296 = vmatpush1.msra.mxu0 %v249
          %297 = vmatprep.subr.mxu0 0.0
          %298 = vmatpush1.msra.mxu0 %v250
          %299 = vmatprep.subr.mxu0 0.0
          %300 = vmatpush1.msra.mxu0 %v251
          %301 = vmatprep.subr.mxu0 0.0
          %302 = vmatpush1.msra.mxu0 %v252
          %303 = vmatprep.subr.mxu0 0.0
          %304 = vmatpush1.msra.mxu0 %v253
          %305 = vmatprep.subr.mxu0 0.0
          %306 = vmatpush1.msra.mxu0 %v254
          %307 = vmatprep.subr.mxu0 0.0
          %308 = vmatpush1.msra.mxu0 %v255
          %309 = vmatprep.subr.mxu0 0.0
          %310 = vmatpush1.msra.mxu0 %v256
          %311 = vmatprep.subr.mxu0 0.0
          %312 = vmatpush1.msra.mxu0 %v257
          %313 = vmatprep.subr.mxu0 0.0
          %314 = vmatpush1.msra.mxu0 %v258
          %315 = vmatprep.subr.mxu0 0.0
          %316 = vmatpush1.msra.mxu0 %v259
          %317 = vmatprep.subr.mxu0 0.0
          %318 = vmatpush1.msra.mxu0 %v260
          %319 = vmatprep.subr.mxu0 0.0
          %320 = vmatpush1.msra.mxu0 %v261
          %321 = vmatprep.subr.mxu0 0.0
          %322 = vmatpush1.msra.mxu0 0.0
          %323 = vmatprep.subr.mxu0 0.0
          %324 = vmatpush1.msra.mxu0 0.0
          %325 = vmatprep.subr.mxu0 0.0
          %326 = vmatpush1.msra.mxu0 0.0
          %327 = vmatprep.subr.mxu0 0.0
          %328 = vmatpush1.msra.mxu0 0.0
          %329 = vmatprep.subr.mxu0 0.0
          %330 = vmatpush1.msra.mxu0 0.0
          %331 = vmatprep.subr.mxu0 0.0
          %332 = vmatpush1.msra.mxu0 0.0
          %333 = vmatprep.subr.mxu0 0.0
          %334 = vmatpush1.msra.mxu0 0.0
          %335 = vmatprep.subr.mxu0 0.0
          %336 = vmatpush1.msra.mxu0 0.0
          %337 = vmatprep.subr.mxu0 0.0
          %338 = vmatpush1.msra.mxu0 0.0
          %339 = vmatprep.subr.mxu0 0.0
          %340 = vmatpush1.msra.mxu0 0.0
          %341 = vmatprep.subr.mxu0 0.0
          %342 = vmatpush1.msra.mxu0 0.0
          %343 = vmatprep.subr.mxu0 0.0
          %344 = vmatpush1.msra.mxu0 0.0
          %345 = vmatprep.subr.mxu0 0.0
          %346 = vmatpush1.msra.mxu0 0.0
          %347 = vmatprep.subr.mxu0 0.0
          %348 = vmatpush1.msra.mxu0 0.0
          %349 = vmatprep.subr.mxu0 0.0
          %350 = vmatpush1.msra.mxu0 0.0
          %351 = vmatprep.subr.mxu0 0.0
          %352 = vmatpush1.msra.mxu0 0.0
          %353 = vmatprep.mubr.f32.mxu0 0.0
          %354 = vmatmul.mubr.f32.gmra.mrb[0].mxu0 %v267
          %v355 = vpop.f32.mrb[0].mxu0
          %v356 = vadd.f32 %v287, %v355
          %v357 = vpop.f32.mrb[0].mxu0
          %358 = vmatprep.mubr.f32.mxu0 0.0
          %359 = vmatmul.mubr.f32.gmra.mrb[0].mxu0 %v268
          %v360 = vpop.f32.mrb[0].mxu0
          %v361 = vadd.f32 %v287, %v360
          %v362 = vpop.f32.mrb[0].mxu0
          %363 = vmatprep.mubr.f32.mxu0 0.0
          %364 = vmatmul.mubr.f32.gmra.mrb[0].mxu0 %v269
          %v365 = vpop.f32.mrb[0].mxu0
          %v366 = vadd.f32 %v287, %v365
          %v367 = vpop.f32.mrb[0].mxu0
          %368 = vmatprep.mubr.f32.mxu0 0.0
          %369 = vmatmul.mubr.f32.gmra.mrb[0].mxu0 %v270
          %v370 = vpop.f32.mrb[0].mxu0
          %v371 = vadd.f32 %v287, %v370
          %v372 = vpop.f32.mrb[0].mxu0
          %373 = vmatprep.mubr.f32.mxu0 0.0
          %374 = vmatmul.mubr.f32.gmra.mrb[0].mxu0 %v271
          %v375 = vpop.f32.mrb[0].mxu0
          %v376 = vadd.f32 %v287, %v375
          %v377 = vpop.f32.mrb[0].mxu0
          %378 = vmatprep.mubr.f32.mxu0 0.0
          %379 = vmatmul.mubr.f32.gmra.mrb[0].mxu0 %v272
          %v380 = vpop.f32.mrb[0].mxu0
          %v381 = vadd.f32 %v287, %v380
          %v382 = vpop.f32.mrb[0].mxu0
          %383 = vmatprep.mubr.f32.mxu0 0.0
          %384 = vmatmul.mubr.f32.gmra.mrb[0].mxu0 %v273
          %v385 = vpop.f32.mrb[0].mxu0
          %v386 = vadd.f32 %v287, %v385
          %v387 = vpop.f32.mrb[0].mxu0
          %388 = vmatprep.mubr.f32.mxu0 0.0
          %389 = vmatmul.mubr.f32.gmra.mrb[0].mxu0 %v274
          %v390 = vpop.f32.mrb[0].mxu0
          %v391 = vadd.f32 %v287, %v390
          %v392 = vpop.f32.mrb[0].mxu0
          %393 = vmatprep.mubr.f32.mxu0 0.0
          %394 = vmatmul.mubr.f32.gmra.mrb[0].mxu0 %v275
          %v395 = vpop.f32.mrb[0].mxu0
          %v396 = vadd.f32 %v287, %v395
          %v397 = vpop.f32.mrb[0].mxu0
          %398 = vmatprep.mubr.f32.mxu0 0.0
          %399 = vmatmul.mubr.f32.gmra.mrb[0].mxu0 %v276
          %v400 = vpop.f32.mrb[0].mxu0
          %v401 = vadd.f32 %v287, %v400
          %v402 = vpop.f32.mrb[0].mxu0
          %403 = vmatprep.mubr.f32.mxu0 0.0
          %404 = vmatmul.mubr.f32.gmra.mrb[0].mxu0 %v277
          %v405 = vpop.f32.mrb[0].mxu0
          %v406 = vadd.f32 %v287, %v405
          %v407 = vpop.f32.mrb[0].mxu0
          %408 = vmatprep.mubr.f32.mxu0 0.0
          %409 = vmatmul.mubr.f32.gmra.mrb[0].mxu0 %v278
          %v410 = vpop.f32.mrb[0].mxu0
          %v411 = vadd.f32 %v287, %v410
          %v412 = vpop.f32.mrb[0].mxu0
          %413 = vmatprep.mubr.f32.mxu0 0.0
          %414 = vmatmul.mubr.f32.gmra.mrb[0].mxu0 %v279
          %v415 = vpop.f32.mrb[0].mxu0
          %v416 = vadd.f32 %v287, %v415
          %v417 = vpop.f32.mrb[0].mxu0
          %418 = vmatprep.mubr.f32.mxu0 0.0
          %419 = vmatmul.mubr.f32.gmra.mrb[0].mxu0 %v280
          %v420 = vpop.f32.mrb[0].mxu0
          %v421 = vadd.f32 %v287, %v420
          %v422 = vpop.f32.mrb[0].mxu0
          %423 = vmatprep.mubr.f32.mxu0 0.0
          %424 = vmatmul.mubr.f32.gmra.mrb[0].mxu0 %v281
          %v425 = vpop.f32.mrb[0].mxu0
          %v426 = vadd.f32 %v287, %v425
          %v427 = vpop.f32.mrb[0].mxu0
          %428 = vmatprep.mubr.f32.mxu0 0.0
          %429 = vmatmul.mubr.f32.gmra.mrb[0].mxu0 %v282
          %v430 = vpop.f32.mrb[0].mxu0
          %v431 = vadd.f32 %v287, %v430
          %v432 = vpop.f32.mrb[0].mxu0
          %433 = vdwg.mxu0
          %434 = vst [vmem:[#allocation2] sm:$0xff] %v356
          %435 = vst [vmem:[#allocation2 + $0x8] sm:$0xff] %v361
          %436 = vst [vmem:[#allocation2 + $0x10] sm:$0xff] %v366
          %437 = vst [vmem:[#allocation2 + $0x18] sm:$0xff] %v371
          %438 = vst [vmem:[#allocation2 + $0x20] sm:$0xff] %v376
          %439 = vst [vmem:[#allocation2 + $0x28] sm:$0xff] %v381
          %440 = vst [vmem:[#allocation2 + $0x30] sm:$0xff] %v386
          %441 = vst [vmem:[#allocation2 + $0x38] sm:$0xff] %v391
          %442 = vst [vmem:[#allocation2 + $0x40] sm:$0xff] %v396
          %443 = vst [vmem:[#allocation2 + $0x48] sm:$0xff] %v401
          %444 = vst [vmem:[#allocation2 + $0x50] sm:$0xff] %v406
          %445 = vst [vmem:[#allocation2 + $0x58] sm:$0xff] %v411
          %446 = vst [vmem:[#allocation2 + $0x60] sm:$0xff] %v416
          %447 = vst [vmem:[#allocation2 + $0x68] sm:$0xff] %v421
          %448 = vst [vmem:[#allocation2 + $0x70] sm:$0xff] %v426
          %449 = vst [vmem:[#allocation2 + $0x78] sm:$0xff] %v431
        $region40: #{softsel_forward.1} parent=35 // pred_fallthru
          _
        %v450 = vld [vmem:[%s239] sm:$0xff]
        %v451 = vld [vmem:[#allocation2] sm:$0xff]
        %v452 = vld [vmem:[#allocation2 + $0x8] sm:$0xff]
        %v453 = vld [vmem:[#allocation2 + $0x10] sm:$0xff]
        %v454 = vld [vmem:[#allocation2 + $0x18] sm:$0xff]
        %v455 = vld [vmem:[#allocation2 + $0x20] sm:$0xff]
        %v456 = vld [vmem:[#allocation2 + $0x28] sm:$0xff]
        %v457 = vld [vmem:[#allocation2 + $0x30] sm:$0xff]
        %v458 = vld [vmem:[#allocation2 + $0x38] sm:$0xff]
        %v459 = vld [vmem:[#allocation2 + $0x40] sm:$0xff]
        %v460 = vld [vmem:[#allocation2 + $0x48] sm:$0xff]
        %v461 = vld [vmem:[#allocation2 + $0x50] sm:$0xff]
        %v462 = vld [vmem:[#allocation2 + $0x58] sm:$0xff]
        %v463 = vld [vmem:[#allocation2 + $0x60] sm:$0xff]
        %v464 = vld [vmem:[#allocation2 + $0x68] sm:$0xff]
        %v465 = vld [vmem:[#allocation2 + $0x70] sm:$0xff]
        %v466 = vld [vmem:[#allocation2 + $0x78] sm:$0xff]
        %467 = vmatprep.subr.mxu0 0.0
        %468 = vmatpush1.xpose.msra.mxu0 %v451
        %469 = vmatprep.subr.mxu0 0.0
        %470 = vmatpush1.xpose.msra.mxu0 %v452
        %471 = vmatprep.subr.mxu0 0.0
        %472 = vmatpush1.xpose.msra.mxu0 %v453
        %473 = vmatprep.subr.mxu0 0.0
        %474 = vmatpush1.xpose.msra.mxu0 %v454
        %475 = vmatprep.subr.mxu0 0.0
        %476 = vmatpush1.xpose.msra.mxu0 %v455
        %477 = vmatprep.subr.mxu0 0.0
        %478 = vmatpush1.xpose.msra.mxu0 %v456
        %479 = vmatprep.subr.mxu0 0.0
        %480 = vmatpush1.xpose.msra.mxu0 %v457
        %481 = vmatprep.subr.mxu0 0.0
        %482 = vmatpush1.xpose.msra.mxu0 %v458
        %483 = vmatprep.subr.mxu0 0.0
        %484 = vmatpush1.xpose.msra.mxu0 %v459
        %485 = vmatprep.subr.mxu0 0.0
        %486 = vmatpush1.xpose.msra.mxu0 %v460
        %487 = vmatprep.subr.mxu0 0.0
        %488 = vmatpush1.xpose.msra.mxu0 %v461
        %489 = vmatprep.subr.mxu0 0.0
        %490 = vmatpush1.xpose.msra.mxu0 %v462
        %491 = vmatprep.subr.mxu0 0.0
        %492 = vmatpush1.xpose.msra.mxu0 %v463
        %493 = vmatprep.subr.mxu0 0.0
        %494 = vmatpush1.xpose.msra.mxu0 %v464
        %495 = vmatprep.subr.mxu0 0.0
        %496 = vmatpush1.xpose.msra.mxu0 %v465
        %497 = vmatprep.subr.mxu0 0.0
        %498 = vmatpush1.xpose.msra.mxu0 %v466
        %499 = vmatprep.subr.mxu0 0.0
        %500 = vmatpush1.xpose.msra.mxu0 0.0
        %501 = vmatprep.subr.mxu0 0.0
        %502 = vmatpush1.xpose.msra.mxu0 0.0
        %503 = vmatprep.subr.mxu0 0.0
        %504 = vmatpush1.xpose.msra.mxu0 0.0
        %505 = vmatprep.subr.mxu0 0.0
        %506 = vmatpush1.xpose.msra.mxu0 0.0
        %507 = vmatprep.subr.mxu0 0.0
        %508 = vmatpush1.xpose.msra.mxu0 0.0
        %509 = vmatprep.subr.mxu0 0.0
        %510 = vmatpush1.xpose.msra.mxu0 0.0
        %511 = vmatprep.subr.mxu0 0.0
        %512 = vmatpush1.xpose.msra.mxu0 0.0
        %513 = vmatprep.subr.mxu0 0.0
        %514 = vmatpush1.xpose.msra.mxu0 0.0
        %515 = vmatprep.subr.mxu0 0.0
        %516 = vmatpush1.xpose.msra.mxu0 0.0
        %517 = vmatprep.subr.mxu0 0.0
        %518 = vmatpush1.xpose.msra.mxu0 0.0
        %519 = vmatprep.subr.mxu0 0.0
        %520 = vmatpush1.xpose.msra.mxu0 0.0
        %521 = vmatprep.subr.mxu0 0.0
        %522 = vmatpush1.xpose.msra.mxu0 0.0
        %523 = vmatprep.subr.mxu0 0.0
        %524 = vmatpush1.xpose.msra.mxu0 0.0
        %525 = vmatprep.subr.mxu0 0.0
        %526 = vmatpush1.xpose.msra.mxu0 0.0
        %527 = vmatprep.subr.mxu0 0.0
        %528 = vmatpush1.xpose.msra.mxu0 0.0
        %529 = vmatprep.subr.mxu0 0.0
        %530 = vmatpush1.xpose.msra.mxu0 0.0
        %531 = vmatprep.mubr.f32.mxu0 0.0
        %532 = vmatmul.mubr.f32.gmra.mrb[0].mxu0 %v450
        %v533 = vpop.f32.mrb[0].mxu0
        %v534 = vadd.f32 0.0, %v533
        %v535 = vpop.f32.mrb[0].mxu0
        %536 = vdwg.mxu0
        %v537 = vlaneseq
        %v538 = vand.u32 %v537, 127
        %v539 = vstv %s245
        %vm540 = vcmp.lt.s32.totalorder %v538, %v539
        %v541 = vsel %vm540, 1, 0
        %v542 = vcvt.s32.f32 %v541
        %v543 = vmul.f32 %v534, %v542
        %544 = vmax.xlane.f32.xlu0 %v543
        %v545 = vpop.xlane.xlu0 %544
        %v546 = vsub.f32 %v543, %v545
        %v547 = vmul.f32 %v546, 1.442695
        %v548 = vpow.pop %v547
        %v549 = vmul.f32 %v548, %v542
        %550 = vadd.xlane.f32.xlu0 %v548
        %v551 = vpop.xlane.xlu0 %550
        %552 = vadd.xlane.f32.xlu0 %v549
        %v553 = vpop.xlane.xlu0 %552
        %v554 = vmul.f32 %v551, 1e-13
        %v555 = vadd.f32 %v553, %v554
        %v556 = vrcp.pop %v555
        %v557 = vmul.f32 1.0, %v556
        %v558 = vmul.f32 %v549, %v557
        %v559 = vld [vmem:[%s244] sm:$0xff]
        %v560 = vld [vmem:[%s244 + $0x8] sm:$0xff]
        %v561 = vld [vmem:[%s244 + $0x10] sm:$0xff]
        %v562 = vld [vmem:[%s244 + $0x18] sm:$0xff]
        %v563 = vld [vmem:[%s244 + $0x20] sm:$0xff]
        %v564 = vld [vmem:[%s244 + $0x28] sm:$0xff]
        %v565 = vld [vmem:[%s244 + $0x30] sm:$0xff]
        %v566 = vld [vmem:[%s244 + $0x38] sm:$0xff]
        %v567 = vld [vmem:[%s244 + $0x40] sm:$0xff]
        %v568 = vld [vmem:[%s244 + $0x48] sm:$0xff]
        %v569 = vld [vmem:[%s244 + $0x50] sm:$0xff]
        %v570 = vld [vmem:[%s244 + $0x58] sm:$0xff]
        %v571 = vld [vmem:[%s244 + $0x60] sm:$0xff]
        %v572 = vld [vmem:[%s244 + $0x68] sm:$0xff]
        %v573 = vld [vmem:[%s244 + $0x70] sm:$0xff]
        %v574 = vld [vmem:[%s244 + $0x78] sm:$0xff]
        %575 = vmatprep.subr.mxu0 0.0
        %576 = vmatpush1.msra.mxu0 %v559
        %577 = vmatprep.subr.mxu0 0.0
        %578 = vmatpush1.msra.mxu0 %v560
        %579 = vmatprep.subr.mxu0 0.0
        %580 = vmatpush1.msra.mxu0 %v561
        %581 = vmatprep.subr.mxu0 0.0
        %582 = vmatpush1.msra.mxu0 %v562
        %583 = vmatprep.subr.mxu0 0.0
        %584 = vmatpush1.msra.mxu0 %v563
        %585 = vmatprep.subr.mxu0 0.0
        %586 = vmatpush1.msra.mxu0 %v564
        %587 = vmatprep.subr.mxu0 0.0
        %588 = vmatpush1.msra.mxu0 %v565
        %589 = vmatprep.subr.mxu0 0.0
        %590 = vmatpush1.msra.mxu0 %v566
        %591 = vmatprep.subr.mxu0 0.0
        %592 = vmatpush1.msra.mxu0 %v567
        %593 = vmatprep.subr.mxu0 0.0
        %594 = vmatpush1.msra.mxu0 %v568
        %595 = vmatprep.subr.mxu0 0.0
        %596 = vmatpush1.msra.mxu0 %v569
        %597 = vmatprep.subr.mxu0 0.0
        %598 = vmatpush1.msra.mxu0 %v570
        %599 = vmatprep.subr.mxu0 0.0
        %600 = vmatpush1.msra.mxu0 %v571
        %601 = vmatprep.subr.mxu0 0.0
        %602 = vmatpush1.msra.mxu0 %v572
        %603 = vmatprep.subr.mxu0 0.0
        %604 = vmatpush1.msra.mxu0 %v573
        %605 = vmatprep.subr.mxu0 0.0
        %606 = vmatpush1.msra.mxu0 %v574
        %607 = vmatprep.subr.mxu0 0.0
        %608 = vmatpush1.msra.mxu0 0.0
        %609 = vmatprep.subr.mxu0 0.0
        %610 = vmatpush1.msra.mxu0 0.0
        %611 = vmatprep.subr.mxu0 0.0
        %612 = vmatpush1.msra.mxu0 0.0
        %613 = vmatprep.subr.mxu0 0.0
        %614 = vmatpush1.msra.mxu0 0.0
        %615 = vmatprep.subr.mxu0 0.0
        %616 = vmatpush1.msra.mxu0 0.0
        %617 = vmatprep.subr.mxu0 0.0
        %618 = vmatpush1.msra.mxu0 0.0
        %619 = vmatprep.subr.mxu0 0.0
        %620 = vmatpush1.msra.mxu0 0.0
        %621 = vmatprep.subr.mxu0 0.0
        %622 = vmatpush1.msra.mxu0 0.0
        %623 = vmatprep.subr.mxu0 0.0
        %624 = vmatpush1.msra.mxu0 0.0
        %625 = vmatprep.subr.mxu0 0.0
        %626 = vmatpush1.msra.mxu0 0.0
        %627 = vmatprep.subr.mxu0 0.0
        %628 = vmatpush1.msra.mxu0 0.0
        %629 = vmatprep.subr.mxu0 0.0
        %630 = vmatpush1.msra.mxu0 0.0
        %631 = vmatprep.subr.mxu0 0.0
        %632 = vmatpush1.msra.mxu0 0.0
        %633 = vmatprep.subr.mxu0 0.0
        %634 = vmatpush1.msra.mxu0 0.0
        %635 = vmatprep.subr.mxu0 0.0
        %636 = vmatpush1.msra.mxu0 0.0
        %637 = vmatprep.subr.mxu0 0.0
        %638 = vmatpush1.msra.mxu0 0.0
        %639 = vmatprep.mubr.f32.mxu0 0.0
        %640 = vmatmul.mubr.f32.gmra.mrb[0].mxu0 %v558
        %v641 = vpop.f32.mrb[0].mxu0
        %v642 = vadd.f32 0.0, %v641
        %v643 = vpop.f32.mrb[0].mxu0
        %644 = vdwg.mxu0
        %v646 = vlaneseq
        %v647 = vshrl.u32 %v646, 7
        %v648 = vsub.s32 0, %v647
        %v649 = vrot.slane %v262, %v648
        %651 = vmatprep.subr.mxu0 0.0
        %652 = vmatpush1.msra.mxu0 %v246
        %653 = vmatprep.subr.mxu0 0.0
        %654 = vmatpush1.msra.mxu0 %v247
        %655 = vmatprep.subr.mxu0 0.0
        %656 = vmatpush1.msra.mxu0 %v248
        %657 = vmatprep.subr.mxu0 0.0
        %658 = vmatpush1.msra.mxu0 %v249
        %659 = vmatprep.subr.mxu0 0.0
        %660 = vmatpush1.msra.mxu0 %v250
        %661 = vmatprep.subr.mxu0 0.0
        %662 = vmatpush1.msra.mxu0 %v251
        %663 = vmatprep.subr.mxu0 0.0
        %664 = vmatpush1.msra.mxu0 %v252
        %665 = vmatprep.subr.mxu0 0.0
        %666 = vmatpush1.msra.mxu0 %v253
        %667 = vmatprep.subr.mxu0 0.0
        %668 = vmatpush1.msra.mxu0 %v254
        %669 = vmatprep.subr.mxu0 0.0
        %670 = vmatpush1.msra.mxu0 %v255
        %671 = vmatprep.subr.mxu0 0.0
        %672 = vmatpush1.msra.mxu0 %v256
        %673 = vmatprep.subr.mxu0 0.0
        %674 = vmatpush1.msra.mxu0 %v257
        %675 = vmatprep.subr.mxu0 0.0
        %676 = vmatpush1.msra.mxu0 %v258
        %677 = vmatprep.subr.mxu0 0.0
        %678 = vmatpush1.msra.mxu0 %v259
        %679 = vmatprep.subr.mxu0 0.0
        %680 = vmatpush1.msra.mxu0 %v260
        %681 = vmatprep.subr.mxu0 0.0
        %682 = vmatpush1.msra.mxu0 %v261
        %683 = vmatprep.subr.mxu0 0.0
        %684 = vmatpush1.msra.mxu0 0.0
        %685 = vmatprep.subr.mxu0 0.0
        %686 = vmatpush1.msra.mxu0 0.0
        %687 = vmatprep.subr.mxu0 0.0
        %688 = vmatpush1.msra.mxu0 0.0
        %689 = vmatprep.subr.mxu0 0.0
        %690 = vmatpush1.msra.mxu0 0.0
        %691 = vmatprep.subr.mxu0 0.0
        %692 = vmatpush1.msra.mxu0 0.0
        %693 = vmatprep.subr.mxu0 0.0
        %694 = vmatpush1.msra.mxu0 0.0
        %695 = vmatprep.subr.mxu0 0.0
        %696 = vmatpush1.msra.mxu0 0.0
        %697 = vmatprep.subr.mxu0 0.0
        %698 = vmatpush1.msra.mxu0 0.0
        %699 = vmatprep.subr.mxu0 0.0
        %700 = vmatpush1.msra.mxu0 0.0
        %701 = vmatprep.subr.mxu0 0.0
        %702 = vmatpush1.msra.mxu0 0.0
        %703 = vmatprep.subr.mxu0 0.0
        %704 = vmatpush1.msra.mxu0 0.0
        %705 = vmatprep.subr.mxu0 0.0
        %706 = vmatpush1.msra.mxu0 0.0
        %707 = vmatprep.subr.mxu0 0.0
        %708 = vmatpush1.msra.mxu0 0.0
        %709 = vmatprep.subr.mxu0 0.0
        %710 = vmatpush1.msra.mxu0 0.0
        %711 = vmatprep.subr.mxu0 0.0
        %712 = vmatpush1.msra.mxu0 0.0
        %713 = vmatprep.subr.mxu0 0.0
        %714 = vmatpush1.msra.mxu0 0.0
        %715 = vmatprep.mubr.f32.mxu0 0.0
        %716 = vmatmul.mubr.f32.gmra.mrb[0].mxu0 %v642
        %v717 = vpop.f32.mrb[0].mxu0
        %v718 = vadd.f32 %v649, %v717
        %v719 = vpop.f32.mrb[0].mxu0
        %720 = vdwg.mxu0
        %v721 = vmax.f32 %v718, 0.0
        %722 = vst [vmem:[%s232] sm:$0xff] %v721
        %s723 = sand.u32 %s143, 1
        %s724 = scalar_lea.sflag [#allocation6], %s723
        %s725 = sand.u32 %s143, 1
        %s726 = smul.addr %s725, 8
        %s727 = scalar_lea.vmem [#allocation5], %s726
        // Predicated region
        $region41: #{softsel_forward.1} parent=35 // pred_check
          %p728 = pneg %p153
        $region42: #{softsel_forward.1} parent=35 // pred_check_branch
          %730 = sbr.rel (%p728) target = $region44
        $region43: #{softsel_forward.1} parent=35 // pred_region
          %s732 = ssub.s32 128, 128
          %733 = vsyncadd %s724, %s732
          %s734 = sadd.s32 %s30, %s29
          %s735 = smul.addr %s734, 128
          %s736 = scalar_lea.hbm %s5, %s735
          %s738 = sshll.u32 %s727, 4
          %s739 = int_to_ptr.vmem [resolvable:$true] %s738
          %741 = dma.vmem_to_hbm [thread:$0]  %s739, 128, %s736, %s724
        $region44: #{softsel_forward.1} parent=35 // pred_fallthru
          _
      $region36: #{softsel_forward.1} parent=5 // pred_fallthru
        _
      %p742 = scmp.le.s32.totalorder 2, %s20
      // Predicated region
      $region45: #{softsel_forward.1} parent=5 // pred_check
        %p743 = pneg %p742
      $region46: #{softsel_forward.1} parent=5 // pred_check_branch
        %745 = sbr.rel (%p743) target = $region48
      $region47: #{softsel_forward.1} parent=5 // pred_region
        %s746 = ssub.s32 %s20, 2
        // Predicated region
        $region49: #{softsel_forward.1} parent=47 // pred_check
          %p747 = pneg %p159
        $region50: #{softsel_forward.1} parent=47 // pred_check_branch
          %749 = sbr.rel (%p747) target = $region52
        $region51: #{softsel_forward.1} parent=47 // pred_region
          %s750 = sand.u32 %s144, 1
          %s751 = scalar_lea.sflag [#allocation6], %s750
          %s752 = sand.u32 %s144, 1
          %s753 = smul.addr %s752, 8
          %s754 = scalar_lea.vmem [#allocation5], %s753
          %755 = dma.done %s751, 128
        $region52: #{softsel_forward.1} parent=47 // pred_fallthru
          _
      $region48: #{softsel_forward.1} parent=5 // pred_fallthru
        _
    $region6: #{softsel_forward.1} parent=1 // loop_footer
      %s24 = sadd.s32 1, %s20
    $region7: #{softsel_forward.1} parent=1 // loop_footer_branch
      %19 = sbr.rel target = $region3
    $region8: #{softsel_forward.1} parent=1 // loop_exit
      _
    %756 = vsyncpa [#allocation6], 1
    %s757 = scalar_lea.sflag [#allocation6], 1
    %758 = vsyncpa %s757, 1

</llo_original>
